<compile_context>
chip_gen: v5e
topology: v5e:2x2
jax: 0.10.0
libtpu: 0.0.40
codegen_flags: <defaults>
</compile_context>

<pallas_src>
import functools

import numpy as np
import jax
import jax.numpy as jnp
from jax import lax
from jax.experimental import pallas as pl
from jax.experimental.pallas import tpu as pltpu


def _round_up(x, m):
    return ((x + m - 1) // m) * m


# ----------------------------- Pallas kernel ---------------------------------
def _statevec_kernel(coef_ref, out_re_ref, out_im_ref, *, n_qubits):
    """One grid step == the FULL circuit applied to one sample tile.

    coef_ref:   (L, 8*Q, S_tile) per-sample Rot 2x2 entries, samples on lanes,
                row order per qubit: [m00r,m00i,m01r,m01i,m10r,m10i,m11r,m11i].
    out_*_ref:  (D_pad, S_tile)  final state planes (Hilbert dim on sublanes).
    """
    n_layers = coef_ref.shape[0]
    Dp, S = out_re_ref.shape

    # Per-qubit / per-CNOT sublane bit masks, hoisted out of the layer loop.
    sub = lax.broadcasted_iota(jnp.int32, (Dp, 1), 0)
    rot_bits = []
    for q in range(n_qubits):
        w = 1 << (n_qubits - 1 - q)
        rot_bits.append((w, (sub & w) == 0))
    cnot_bits = []
    pairs = [(c, c + 1) for c in range(n_qubits - 1)] + [(n_qubits - 1, 0)]
    for ctrl, tgt in pairs:
        wc = 1 << (n_qubits - 1 - ctrl)
        wt = 1 << (n_qubits - 1 - tgt)
        cnot_bits.append((wt, (sub & wc) != 0, (sub & wt) == 0))

    def apply_layer(cf, vr, vi):
        # ---- Rot layer: n_qubits commuting 2x2 complex updates --------------
        # Qubit q (qubit 0 = MSB) acts on the index bit of weight w = 2**(n-1-q):
        #   bit==0: new[i] = m00*v[i] + m01*v[i+w]
        #   bit==1: new[i] = m10*v[i-w] + m11*v[i]
        # v[i^w] is fetched with two sublane rotations + a select (XLU work).
        for q, (w, bit0) in enumerate(rot_bits):
            m00r = cf[8 * q + 0:8 * q + 1]      # (1, S) sublane rows
            m00i = cf[8 * q + 1:8 * q + 2]
            m01r = cf[8 * q + 2:8 * q + 3]
            m01i = cf[8 * q + 3:8 * q + 4]
            m10r = cf[8 * q + 4:8 * q + 5]
            m10i = cf[8 * q + 5:8 * q + 6]
            m11r = cf[8 * q + 6:8 * q + 7]
            m11i = cf[8 * q + 7:8 * q + 8]

            pr = jnp.where(bit0, pltpu.roll(vr, Dp - w, 0), pltpu.roll(vr, w, 0))
            pi = jnp.where(bit0, pltpu.roll(vi, Dp - w, 0), pltpu.roll(vi, w, 0))
            dr = jnp.where(bit0, m00r, m11r)    # diagonal coefficient  (Dp, S)
            di = jnp.where(bit0, m00i, m11i)
            fr = jnp.where(bit0, m01r, m10r)    # off-diagonal coefficient
            fi = jnp.where(bit0, m01i, m10i)

            nr = dr * vr - di * vi + fr * pr - fi * pi
            ni = dr * vi + di * vr + fr * pi + fi * pr
            vr, vi = nr, ni

        # ---- ring-CNOT layer: sequential conditional bit-flip permutations --
        # CNOT(c, t): new[j] = v[j ^ wt] if control bit of j is 1 else v[j].
        for wt, ctrl_on, tbit0 in cnot_bits:
            pr = jnp.where(tbit0, pltpu.roll(vr, Dp - wt, 0), pltpu.roll(vr, wt, 0))
            pi = jnp.where(tbit0, pltpu.roll(vi, Dp - wt, 0), pltpu.roll(vi, wt, 0))
            vr = jnp.where(ctrl_on, pr, vr)
            vi = jnp.where(ctrl_on, pi, vi)
        return vr, vi

    # |0...0> initial state, built directly as values (no store + reload).
    vr = (lax.broadcasted_iota(jnp.int32, (Dp, S), 0) == 0).astype(jnp.float32)
    vi = jnp.zeros((Dp, S), jnp.float32)

    if n_layers <= 8:
        # Fully unrolled: lets the LLO scheduler overlap the XLU-heavy CNOT
        # stage of layer l with the VALU-heavy Rot math of layer l+1.
        for l in range(n_layers):
            vr, vi = apply_layer(coef_ref[l], vr, vi)
    else:
        vr, vi = lax.fori_loop(
            0, n_layers,
            lambda l, c: apply_layer(coef_ref[l], c[0], c[1]),
            (vr, vi))

    out_re_ref[...] = vr
    out_im_ref[...] = vi


def run_statevec(coefs, n_qubits, n_samples):
    """coefs: (L, 8*Q, n_samples) float32. Returns (n_samples, 2**Q) complex64."""
    L, ncoef, S = coefs.shape
    D = 2 ** n_qubits
    Dp = max(D, 8)                               # sublane axis (Hilbert dim)

    # Generation-aware sample tile: ~10 live f32 planes (state, partners,
    # products, double-buffered outputs) + double-buffered coefficient slab
    # kept within ~12 MiB (under the 16 MiB v5e default scoped VMEM).
    bytes_per_lane = 10 * Dp * 4 + 2 * L * ncoef * 4
    S_tile = 512
    while S_tile > 128 and S_tile * bytes_per_lane > 12 * 2 ** 20:
        S_tile //= 2
    S_tile = min(S_tile, _round_up(n_samples, 128))   # lane-dense (>=128) tiles
    S_pad = _round_up(n_samples, S_tile)
    if S_pad != S:
        coefs = jnp.pad(coefs, ((0, 0), (0, 0), (0, S_pad - S)))
    vmem_limit = int(min(64 * 2 ** 20, max(32 * 2 ** 20, 2 * S_tile * bytes_per_lane)))

    # NOTE(v7x): with a single sample tile (small batch) one of the two
    # TensorCores idles; splitting below 128 lanes would break lane density.
    kernel = functools.partial(_statevec_kernel, n_qubits=n_qubits)
    out_re, out_im = pl.pallas_call(
        kernel,
        out_shape=(jax.ShapeDtypeStruct((Dp, S_pad), jnp.float32),
                   jax.ShapeDtypeStruct((Dp, S_pad), jnp.float32)),
        grid=(S_pad // S_tile,),
        in_specs=[pl.BlockSpec((L, ncoef, S_tile), lambda si: (0, 0, si))],
        out_specs=(pl.BlockSpec((Dp, S_tile), lambda si: (0, si)),
                   pl.BlockSpec((Dp, S_tile), lambda si: (0, si))),
        compiler_params=pltpu.CompilerParams(
            dimension_semantics=("parallel",),
            vmem_limit_bytes=vmem_limit),
    )(coefs)
    re = out_re[:D, :n_samples].T
    im = out_im[:D, :n_samples].T
    return lax.complex(re, im)


# ------------------------------ glue (plain JAX / numpy) ----------------------
def _single_cnot_matrix(n_qubits, control, target):
    D = 2 ** n_qubits
    u = np.zeros((D, D), dtype=np.float32)
    for i in range(D):
        bits = list(bin(i)[2:].zfill(n_qubits))
        if bits[control] == '1':
            bits[target] = str(int(bits[target]) ^ 1)
            j = int(''.join(bits), 2)
            u[j, i] = 1.0
        else:
            u[i, i] = 1.0
    return u


def _ring_cnot_matrix(n_qubits):
    # Sequentially applied CNOTs: state <- C_(n-1,0) ... C_(1,2) C_(0,1) state.
    qubit_map = [(i, i + 1) for i in range(n_qubits - 1)] + [(n_qubits - 1, 0)]
    P = np.eye(2 ** n_qubits, dtype=np.float32)
    for c, t in qubit_map:
        P = _single_cnot_matrix(n_qubits, c, t) @ P
    return P


class StateVecSimPallas:
    def __init__(self, n_qubits, n_layers, init_weights_scale=1.0, seed=42):
        assert n_qubits >= 2, "ring CNOT needs at least 2 qubits"
        self.n_qubits = n_qubits
        self.n_layers = n_layers
        key = jax.random.PRNGKey(seed)
        kw, kb = jax.random.split(key)
        # deterministic synthetic parameters (same shapes as the torch module)
        self.weights = init_weights_scale * jax.random.uniform(
            kw, (n_layers, n_qubits, 3), jnp.float32)
        self.bias = init_weights_scale * jax.random.uniform(
            kb, (n_layers, n_qubits, 3), jnp.float32)
        self.ring_cnot = jnp.asarray(_ring_cnot_matrix(n_qubits))   # reference only

    def get_angles(self, X):
        n_samples, n_features = X.shape
        n_angles = self.n_qubits * self.n_layers * 3
        num_reps = n_angles // n_features + 1
        X_exp = jnp.tile(X, (1, num_reps))[:, :n_angles].reshape(
            n_samples, self.n_layers, self.n_qubits, 3)
        return X_exp * self.weights[None] + self.bias[None]

    def rot_coefficients(self, angles):
        """angles (S, L, Q, 3) -> kernel coefficients (L, 8*Q, S) float32.

        Real/imag parts of the single-qubit Rot entries are emitted directly,
        samples on the last (lane) axis; no complex intermediates, no dense
        system unitaries.
        """
        phi, theta, omega = angles[..., 0], angles[..., 1], angles[..., 2]
        ct = jnp.cos(theta / 2)
        st = jnp.sin(theta / 2)
        ppo = (phi + omega) / 2
        pmo = (phi - omega) / 2
        cp, sp = jnp.cos(ppo), jnp.sin(ppo)
        cm, sm = jnp.cos(pmo), jnp.sin(pmo)
        C = jnp.stack([cp * ct, -sp * ct,      # m00 = exp(-i*ppo)*cos(t/2)
                       -cm * st, -sm * st,     # m01 = -exp(+i*pmo)*sin(t/2)
                       cm * st, -sm * st,      # m10 =  exp(-i*pmo)*sin(t/2)
                       cp * ct, sp * ct],      # m11 =  exp(+i*ppo)*cos(t/2)
                      axis=-1)                 # (S, L, Q, 8)
        C = jnp.transpose(C, (1, 2, 3, 0))     # (L, Q, 8, S)
        C = C.reshape(self.n_layers, 8 * self.n_qubits, -1)
        return C.astype(jnp.float32)

    # ---- dense-unitary construction, kept ONLY for the pure-JAX reference ----
    def rot_layer_unitaries(self, angles):
        """angles: (S, L, Q, 3) -> per-layer system unitaries (L, S, D, D) c64."""
        S = angles.shape[0]
        A = jnp.transpose(angles, (1, 0, 2, 3))              # (L, S, Q, 3)
        ct = jnp.cos(A[..., 1] / 2)
        st = jnp.sin(A[..., 1] / 2)
        ppo = (A[..., 0] + A[..., 2]) / 2
        pmo = (A[..., 0] - A[..., 2]) / 2
        m00 = jnp.exp(-1j * ppo) * ct
        m01 = -jnp.exp(1j * pmo) * st
        m10 = jnp.exp(-1j * pmo) * st
        m11 = jnp.exp(1j * ppo) * ct
        M = jnp.stack([m00, m01, m10, m11], axis=-1).reshape(
            self.n_layers, S, self.n_qubits, 2, 2)            # (L, S, Q, 2, 2)
        U = M[:, :, 0]                                        # kron, qubit 0 = MSB
        for q in range(1, self.n_qubits):
            d = U.shape[-1]
            U = jnp.einsum('lsbc,lsde->lsbdce', U, M[:, :, q]).reshape(
                self.n_layers, S, d * 2, d * 2)
        return U.astype(jnp.complex64)

    def __call__(self, X):
        angles = self.get_angles(X)                           # (S, L, Q, 3)
        coefs = self.rot_coefficients(angles)                 # (L, 8Q, S) f32
        return run_statevec(coefs, self.n_qubits, X.shape[0])


def reference_forward(model, X):
    """Pure-JAX reference of the torch forward (complex64, dense unitaries)."""
    S = X.shape[0]
    D = 2 ** model.n_qubits
    state = jnp.zeros((S, D), jnp.complex64).at[:, 0].set(1.0)
    U = model.rot_layer_unitaries(model.get_angles(X))
    P = model.ring_cnot.astype(jnp.complex64)
    for l in range(model.n_layers):
        state = jnp.einsum('sij,sj->si', U[l], state)
        state = jnp.einsum('ij,sj->si', P, state)
    return state


if __name__ == "__main__":
    n_qubits, n_layers = 3, 2
    n_samples, n_features = 2, 5

    model = StateVecSimPallas(n_qubits, n_layers, init_weights_scale=1.0, seed=42)
    X = jax.random.uniform(jax.random.PRNGKey(0), (n_samples, n_features), jnp.float32)

    out = model(X)                     # (n_samples, 2**n_qubits) complex64
    out = jax.block_until_ready(out)

    ref = reference_forward(model, X)
    np.testing.assert_allclose(np.asarray(out), np.asarray(ref), rtol=1e-4, atol=1e-5)

    print("KERNEL_OK")
</pallas_src>

<mosaic_0001>
module attributes {stable_mosaic.version = 11 : i64} {
  func.func @_statevec_kernel(%arg0: i32, %arg1: memref<2x24x128xf32, #tpu.memory_space<vmem>>, %arg2: memref<8x128xf32, #tpu.memory_space<vmem>>, %arg3: memref<8x128xf32, #tpu.memory_space<vmem>>) attributes {dimension_semantics = [#tpu.dimension_semantics<parallel>], iteration_bounds = array<i64: 1>, scalar_prefetch = 0 : i64, scratch_operands = 0 : i64, tpu.core_type = #tpu.core_type<tc>, window_params = [{transform_indices = @transform_0, window_bounds = array<i64: 2, 24, 128>}, {transform_indices = @transform_1, window_bounds = array<i64: 8, 128>}, {transform_indices = @transform_2, window_bounds = array<i64: 8, 128>}]} {
    %0 = tpu.iota {dimensions = array<i32: 0>} : vector<8x1xi32>
    %c4_i32 = arith.constant 4 : i32
    %1 = vector.broadcast %c4_i32 : i32 to vector<8x1xi32>
    %2 = arith.andi %0, %1 : vector<8x1xi32>
    %c0_i32 = arith.constant 0 : i32
    %3 = vector.broadcast %c0_i32 : i32 to vector<8x1xi32>
    %4 = arith.cmpi eq, %2, %3 : vector<8x1xi32>
    %c2_i32 = arith.constant 2 : i32
    %5 = vector.broadcast %c2_i32 : i32 to vector<8x1xi32>
    %6 = arith.andi %0, %5 : vector<8x1xi32>
    %c0_i32_0 = arith.constant 0 : i32
    %7 = vector.broadcast %c0_i32_0 : i32 to vector<8x1xi32>
    %8 = arith.cmpi eq, %6, %7 : vector<8x1xi32>
    %c1_i32 = arith.constant 1 : i32
    %9 = vector.broadcast %c1_i32 : i32 to vector<8x1xi32>
    %10 = arith.andi %0, %9 : vector<8x1xi32>
    %c0_i32_1 = arith.constant 0 : i32
    %11 = vector.broadcast %c0_i32_1 : i32 to vector<8x1xi32>
    %12 = arith.cmpi eq, %10, %11 : vector<8x1xi32>
    %c4_i32_2 = arith.constant 4 : i32
    %13 = vector.broadcast %c4_i32_2 : i32 to vector<8x1xi32>
    %14 = arith.andi %0, %13 : vector<8x1xi32>
    %c0_i32_3 = arith.constant 0 : i32
    %15 = vector.broadcast %c0_i32_3 : i32 to vector<8x1xi32>
    %16 = arith.cmpi ne, %14, %15 : vector<8x1xi32>
    %c2_i32_4 = arith.constant 2 : i32
    %17 = vector.broadcast %c2_i32_4 : i32 to vector<8x1xi32>
    %18 = arith.andi %0, %17 : vector<8x1xi32>
    %c0_i32_5 = arith.constant 0 : i32
    %19 = vector.broadcast %c0_i32_5 : i32 to vector<8x1xi32>
    %20 = arith.cmpi eq, %18, %19 : vector<8x1xi32>
    %c2_i32_6 = arith.constant 2 : i32
    %21 = vector.broadcast %c2_i32_6 : i32 to vector<8x1xi32>
    %22 = arith.andi %0, %21 : vector<8x1xi32>
    %c0_i32_7 = arith.constant 0 : i32
    %23 = vector.broadcast %c0_i32_7 : i32 to vector<8x1xi32>
    %24 = arith.cmpi ne, %22, %23 : vector<8x1xi32>
    %c1_i32_8 = arith.constant 1 : i32
    %25 = vector.broadcast %c1_i32_8 : i32 to vector<8x1xi32>
    %26 = arith.andi %0, %25 : vector<8x1xi32>
    %c0_i32_9 = arith.constant 0 : i32
    %27 = vector.broadcast %c0_i32_9 : i32 to vector<8x1xi32>
    %28 = arith.cmpi eq, %26, %27 : vector<8x1xi32>
    %c1_i32_10 = arith.constant 1 : i32
    %29 = vector.broadcast %c1_i32_10 : i32 to vector<8x1xi32>
    %30 = arith.andi %0, %29 : vector<8x1xi32>
    %c0_i32_11 = arith.constant 0 : i32
    %31 = vector.broadcast %c0_i32_11 : i32 to vector<8x1xi32>
    %32 = arith.cmpi ne, %30, %31 : vector<8x1xi32>
    %c4_i32_12 = arith.constant 4 : i32
    %33 = vector.broadcast %c4_i32_12 : i32 to vector<8x1xi32>
    %34 = arith.andi %0, %33 : vector<8x1xi32>
    %c0_i32_13 = arith.constant 0 : i32
    %35 = vector.broadcast %c0_i32_13 : i32 to vector<8x1xi32>
    %36 = arith.cmpi eq, %34, %35 : vector<8x1xi32>
    %37 = tpu.iota {dimensions = array<i32: 0>} : vector<8x128xi32>
    %c0_i32_14 = arith.constant 0 : i32
    %38 = vector.broadcast %c0_i32_14 : i32 to vector<8x128xi32>
    %39 = arith.cmpi eq, %37, %38 : vector<8x128xi32>
    %40 = arith.extui %39 : vector<8x128xi1> to vector<8x128xi32>
    %41 = arith.sitofp %40 : vector<8x128xi32> to vector<8x128xf32>
    %cst = arith.constant 0.000000e+00 : f32
    %42 = vector.broadcast %cst : f32 to vector<8x128xf32>
    %c0 = arith.constant 0 : index
    %c0_15 = arith.constant 0 : index
    %c0_16 = arith.constant 0 : index
    %43 = vector.load %arg1[%c0, %c0_15, %c0_16] : memref<2x24x128xf32, #tpu.memory_space<vmem>>, vector<1x24x128xf32>
    %44 = vector.shape_cast %43 : vector<1x24x128xf32> to vector<24x128xf32>
    %45 = vector.extract_strided_slice %44 {offsets = [0, 0], sizes = [1, 128], strides = [1, 1]} : vector<24x128xf32> to vector<1x128xf32>
    %46 = vector.extract_strided_slice %44 {offsets = [1, 0], sizes = [1, 128], strides = [1, 1]} : vector<24x128xf32> to vector<1x128xf32>
    %47 = vector.extract_strided_slice %44 {offsets = [2, 0], sizes = [1, 128], strides = [1, 1]} : vector<24x128xf32> to vector<1x128xf32>
    %48 = vector.extract_strided_slice %44 {offsets = [3, 0], sizes = [1, 128], strides = [1, 1]} : vector<24x128xf32> to vector<1x128xf32>
    %49 = vector.extract_strided_slice %44 {offsets = [4, 0], sizes = [1, 128], strides = [1, 1]} : vector<24x128xf32> to vector<1x128xf32>
    %50 = vector.extract_strided_slice %44 {offsets = [5, 0], sizes = [1, 128], strides = [1, 1]} : vector<24x128xf32> to vector<1x128xf32>
    %51 = vector.extract_strided_slice %44 {offsets = [6, 0], sizes = [1, 128], strides = [1, 1]} : vector<24x128xf32> to vector<1x128xf32>
    %52 = vector.extract_strided_slice %44 {offsets = [7, 0], sizes = [1, 128], strides = [1, 1]} : vector<24x128xf32> to vector<1x128xf32>
    %c4_i32_17 = arith.constant 4 : i32
    %53 = tpu.dynamic_rotate %41 by %c4_i32_17 dim 0 : vector<8x128xf32>, i32 -> vector<8x128xf32>
    %c4_i32_18 = arith.constant 4 : i32
    %54 = tpu.dynamic_rotate %41 by %c4_i32_18 dim 0 : vector<8x128xf32>, i32 -> vector<8x128xf32>
    %55 = vector.shape_cast %4 : vector<8x1xi1> to vector<8x1xi1>
    %56 = vector.broadcast %55 : vector<8x1xi1> to vector<8x128xi1>
    %57 = arith.select %56, %53, %54 : vector<8x128xi1>, vector<8x128xf32>
    %c4_i32_19 = arith.constant 4 : i32
    %58 = tpu.dynamic_rotate %42 by %c4_i32_19 dim 0 : vector<8x128xf32>, i32 -> vector<8x128xf32>
    %c4_i32_20 = arith.constant 4 : i32
    %59 = tpu.dynamic_rotate %42 by %c4_i32_20 dim 0 : vector<8x128xf32>, i32 -> vector<8x128xf32>
    %60 = vector.shape_cast %4 : vector<8x1xi1> to vector<8x1xi1>
    %61 = vector.broadcast %60 : vector<8x1xi1> to vector<8x128xi1>
    %62 = arith.select %61, %58, %59 : vector<8x128xi1>, vector<8x128xf32>
    %63 = vector.shape_cast %4 : vector<8x1xi1> to vector<8x1xi1>
    %64 = vector.broadcast %63 : vector<8x1xi1> to vector<8x128xi1>
    %65 = vector.shape_cast %45 : vector<1x128xf32> to vector<1x128xf32>
    %66 = vector.broadcast %65 : vector<1x128xf32> to vector<8x128xf32>
    %67 = vector.shape_cast %51 : vector<1x128xf32> to vector<1x128xf32>
    %68 = vector.broadcast %67 : vector<1x128xf32> to vector<8x128xf32>
    %69 = arith.select %64, %66, %68 : vector<8x128xi1>, vector<8x128xf32>
    %70 = vector.shape_cast %4 : vector<8x1xi1> to vector<8x1xi1>
    %71 = vector.broadcast %70 : vector<8x1xi1> to vector<8x128xi1>
    %72 = vector.shape_cast %46 : vector<1x128xf32> to vector<1x128xf32>
    %73 = vector.broadcast %72 : vector<1x128xf32> to vector<8x128xf32>
    %74 = vector.shape_cast %52 : vector<1x128xf32> to vector<1x128xf32>
    %75 = vector.broadcast %74 : vector<1x128xf32> to vector<8x128xf32>
    %76 = arith.select %71, %73, %75 : vector<8x128xi1>, vector<8x128xf32>
    %77 = vector.shape_cast %4 : vector<8x1xi1> to vector<8x1xi1>
    %78 = vector.broadcast %77 : vector<8x1xi1> to vector<8x128xi1>
    %79 = vector.shape_cast %47 : vector<1x128xf32> to vector<1x128xf32>
    %80 = vector.broadcast %79 : vector<1x128xf32> to vector<8x128xf32>
    %81 = vector.shape_cast %49 : vector<1x128xf32> to vector<1x128xf32>
    %82 = vector.broadcast %81 : vector<1x128xf32> to vector<8x128xf32>
    %83 = arith.select %78, %80, %82 : vector<8x128xi1>, vector<8x128xf32>
    %84 = vector.shape_cast %4 : vector<8x1xi1> to vector<8x1xi1>
    %85 = vector.broadcast %84 : vector<8x1xi1> to vector<8x128xi1>
    %86 = vector.shape_cast %48 : vector<1x128xf32> to vector<1x128xf32>
    %87 = vector.broadcast %86 : vector<1x128xf32> to vector<8x128xf32>
    %88 = vector.shape_cast %50 : vector<1x128xf32> to vector<1x128xf32>
    %89 = vector.broadcast %88 : vector<1x128xf32> to vector<8x128xf32>
    %90 = arith.select %85, %87, %89 : vector<8x128xi1>, vector<8x128xf32>
    %91 = arith.mulf %69, %41 : vector<8x128xf32>
    %92 = arith.mulf %76, %42 : vector<8x128xf32>
    %93 = arith.subf %91, %92 : vector<8x128xf32>
    %94 = arith.mulf %83, %57 : vector<8x128xf32>
    %95 = arith.addf %93, %94 : vector<8x128xf32>
    %96 = arith.mulf %90, %62 : vector<8x128xf32>
    %97 = arith.subf %95, %96 : vector<8x128xf32>
    %98 = arith.mulf %69, %42 : vector<8x128xf32>
    %99 = arith.mulf %76, %41 : vector<8x128xf32>
    %100 = arith.addf %98, %99 : vector<8x128xf32>
    %101 = arith.mulf %83, %62 : vector<8x128xf32>
    %102 = arith.addf %100, %101 : vector<8x128xf32>
    %103 = arith.mulf %90, %57 : vector<8x128xf32>
    %104 = arith.addf %102, %103 : vector<8x128xf32>
    %105 = vector.extract_strided_slice %44 {offsets = [8, 0], sizes = [1, 128], strides = [1, 1]} : vector<24x128xf32> to vector<1x128xf32>
    %106 = vector.extract_strided_slice %44 {offsets = [9, 0], sizes = [1, 128], strides = [1, 1]} : vector<24x128xf32> to vector<1x128xf32>
    %107 = vector.extract_strided_slice %44 {offsets = [10, 0], sizes = [1, 128], strides = [1, 1]} : vector<24x128xf32> to vector<1x128xf32>
    %108 = vector.extract_strided_slice %44 {offsets = [11, 0], sizes = [1, 128], strides = [1, 1]} : vector<24x128xf32> to vector<1x128xf32>
    %109 = vector.extract_strided_slice %44 {offsets = [12, 0], sizes = [1, 128], strides = [1, 1]} : vector<24x128xf32> to vector<1x128xf32>
    %110 = vector.extract_strided_slice %44 {offsets = [13, 0], sizes = [1, 128], strides = [1, 1]} : vector<24x128xf32> to vector<1x128xf32>
    %111 = vector.extract_strided_slice %44 {offsets = [14, 0], sizes = [1, 128], strides = [1, 1]} : vector<24x128xf32> to vector<1x128xf32>
    %112 = vector.extract_strided_slice %44 {offsets = [15, 0], sizes = [1, 128], strides = [1, 1]} : vector<24x128xf32> to vector<1x128xf32>
    %c6_i32 = arith.constant 6 : i32
    %113 = tpu.dynamic_rotate %97 by %c6_i32 dim 0 : vector<8x128xf32>, i32 -> vector<8x128xf32>
    %c2_i32_21 = arith.constant 2 : i32
    %114 = tpu.dynamic_rotate %97 by %c2_i32_21 dim 0 : vector<8x128xf32>, i32 -> vector<8x128xf32>
    %115 = vector.shape_cast %8 : vector<8x1xi1> to vector<8x1xi1>
    %116 = vector.broadcast %115 : vector<8x1xi1> to vector<8x128xi1>
    %117 = arith.select %116, %113, %114 : vector<8x128xi1>, vector<8x128xf32>
    %c6_i32_22 = arith.constant 6 : i32
    %118 = tpu.dynamic_rotate %104 by %c6_i32_22 dim 0 : vector<8x128xf32>, i32 -> vector<8x128xf32>
    %c2_i32_23 = arith.constant 2 : i32
    %119 = tpu.dynamic_rotate %104 by %c2_i32_23 dim 0 : vector<8x128xf32>, i32 -> vector<8x128xf32>
    %120 = vector.shape_cast %8 : vector<8x1xi1> to vector<8x1xi1>
    %121 = vector.broadcast %120 : vector<8x1xi1> to vector<8x128xi1>
    %122 = arith.select %121, %118, %119 : vector<8x128xi1>, vector<8x128xf32>
    %123 = vector.shape_cast %8 : vector<8x1xi1> to vector<8x1xi1>
    %124 = vector.broadcast %123 : vector<8x1xi1> to vector<8x128xi1>
    %125 = vector.shape_cast %105 : vector<1x128xf32> to vector<1x128xf32>
    %126 = vector.broadcast %125 : vector<1x128xf32> to vector<8x128xf32>
    %127 = vector.shape_cast %111 : vector<1x128xf32> to vector<1x128xf32>
    %128 = vector.broadcast %127 : vector<1x128xf32> to vector<8x128xf32>
    %129 = arith.select %124, %126, %128 : vector<8x128xi1>, vector<8x128xf32>
    %130 = vector.shape_cast %8 : vector<8x1xi1> to vector<8x1xi1>
    %131 = vector.broadcast %130 : vector<8x1xi1> to vector<8x128xi1>
    %132 = vector.shape_cast %106 : vector<1x128xf32> to vector<1x128xf32>
    %133 = vector.broadcast %132 : vector<1x128xf32> to vector<8x128xf32>
    %134 = vector.shape_cast %112 : vector<1x128xf32> to vector<1x128xf32>
    %135 = vector.broadcast %134 : vector<1x128xf32> to vector<8x128xf32>
    %136 = arith.select %131, %133, %135 : vector<8x128xi1>, vector<8x128xf32>
    %137 = vector.shape_cast %8 : vector<8x1xi1> to vector<8x1xi1>
    %138 = vector.broadcast %137 : vector<8x1xi1> to vector<8x128xi1>
    %139 = vector.shape_cast %107 : vector<1x128xf32> to vector<1x128xf32>
    %140 = vector.broadcast %139 : vector<1x128xf32> to vector<8x128xf32>
    %141 = vector.shape_cast %109 : vector<1x128xf32> to vector<1x128xf32>
    %142 = vector.broadcast %141 : vector<1x128xf32> to vector<8x128xf32>
    %143 = arith.select %138, %140, %142 : vector<8x128xi1>, vector<8x128xf32>
    %144 = vector.shape_cast %8 : vector<8x1xi1> to vector<8x1xi1>
    %145 = vector.broadcast %144 : vector<8x1xi1> to vector<8x128xi1>
    %146 = vector.shape_cast %108 : vector<1x128xf32> to vector<1x128xf32>
    %147 = vector.broadcast %146 : vector<1x128xf32> to vector<8x128xf32>
    %148 = vector.shape_cast %110 : vector<1x128xf32> to vector<1x128xf32>
    %149 = vector.broadcast %148 : vector<1x128xf32> to vector<8x128xf32>
    %150 = arith.select %145, %147, %149 : vector<8x128xi1>, vector<8x128xf32>
    %151 = arith.mulf %129, %97 : vector<8x128xf32>
    %152 = arith.mulf %136, %104 : vector<8x128xf32>
    %153 = arith.subf %151, %152 : vector<8x128xf32>
    %154 = arith.mulf %143, %117 : vector<8x128xf32>
    %155 = arith.addf %153, %154 : vector<8x128xf32>
    %156 = arith.mulf %150, %122 : vector<8x128xf32>
    %157 = arith.subf %155, %156 : vector<8x128xf32>
    %158 = arith.mulf %129, %104 : vector<8x128xf32>
    %159 = arith.mulf %136, %97 : vector<8x128xf32>
    %160 = arith.addf %158, %159 : vector<8x128xf32>
    %161 = arith.mulf %143, %122 : vector<8x128xf32>
    %162 = arith.addf %160, %161 : vector<8x128xf32>
    %163 = arith.mulf %150, %117 : vector<8x128xf32>
    %164 = arith.addf %162, %163 : vector<8x128xf32>
    %165 = vector.extract_strided_slice %44 {offsets = [16, 0], sizes = [1, 128], strides = [1, 1]} : vector<24x128xf32> to vector<1x128xf32>
    %166 = vector.extract_strided_slice %44 {offsets = [17, 0], sizes = [1, 128], strides = [1, 1]} : vector<24x128xf32> to vector<1x128xf32>
    %167 = vector.extract_strided_slice %44 {offsets = [18, 0], sizes = [1, 128], strides = [1, 1]} : vector<24x128xf32> to vector<1x128xf32>
    %168 = vector.extract_strided_slice %44 {offsets = [19, 0], sizes = [1, 128], strides = [1, 1]} : vector<24x128xf32> to vector<1x128xf32>
    %169 = vector.extract_strided_slice %44 {offsets = [20, 0], sizes = [1, 128], strides = [1, 1]} : vector<24x128xf32> to vector<1x128xf32>
    %170 = vector.extract_strided_slice %44 {offsets = [21, 0], sizes = [1, 128], strides = [1, 1]} : vector<24x128xf32> to vector<1x128xf32>
    %171 = vector.extract_strided_slice %44 {offsets = [22, 0], sizes = [1, 128], strides = [1, 1]} : vector<24x128xf32> to vector<1x128xf32>
    %172 = vector.extract_strided_slice %44 {offsets = [23, 0], sizes = [1, 128], strides = [1, 1]} : vector<24x128xf32> to vector<1x128xf32>
    %c7_i32 = arith.constant 7 : i32
    %173 = tpu.dynamic_rotate %157 by %c7_i32 dim 0 : vector<8x128xf32>, i32 -> vector<8x128xf32>
    %c1_i32_24 = arith.constant 1 : i32
    %174 = tpu.dynamic_rotate %157 by %c1_i32_24 dim 0 : vector<8x128xf32>, i32 -> vector<8x128xf32>
    %175 = vector.shape_cast %12 : vector<8x1xi1> to vector<8x1xi1>
    %176 = vector.broadcast %175 : vector<8x1xi1> to vector<8x128xi1>
    %177 = arith.select %176, %173, %174 : vector<8x128xi1>, vector<8x128xf32>
    %c7_i32_25 = arith.constant 7 : i32
    %178 = tpu.dynamic_rotate %164 by %c7_i32_25 dim 0 : vector<8x128xf32>, i32 -> vector<8x128xf32>
    %c1_i32_26 = arith.constant 1 : i32
    %179 = tpu.dynamic_rotate %164 by %c1_i32_26 dim 0 : vector<8x128xf32>, i32 -> vector<8x128xf32>
    %180 = vector.shape_cast %12 : vector<8x1xi1> to vector<8x1xi1>
    %181 = vector.broadcast %180 : vector<8x1xi1> to vector<8x128xi1>
    %182 = arith.select %181, %178, %179 : vector<8x128xi1>, vector<8x128xf32>
    %183 = vector.shape_cast %12 : vector<8x1xi1> to vector<8x1xi1>
    %184 = vector.broadcast %183 : vector<8x1xi1> to vector<8x128xi1>
    %185 = vector.shape_cast %165 : vector<1x128xf32> to vector<1x128xf32>
    %186 = vector.broadcast %185 : vector<1x128xf32> to vector<8x128xf32>
    %187 = vector.shape_cast %171 : vector<1x128xf32> to vector<1x128xf32>
    %188 = vector.broadcast %187 : vector<1x128xf32> to vector<8x128xf32>
    %189 = arith.select %184, %186, %188 : vector<8x128xi1>, vector<8x128xf32>
    %190 = vector.shape_cast %12 : vector<8x1xi1> to vector<8x1xi1>
    %191 = vector.broadcast %190 : vector<8x1xi1> to vector<8x128xi1>
    %192 = vector.shape_cast %166 : vector<1x128xf32> to vector<1x128xf32>
    %193 = vector.broadcast %192 : vector<1x128xf32> to vector<8x128xf32>
    %194 = vector.shape_cast %172 : vector<1x128xf32> to vector<1x128xf32>
    %195 = vector.broadcast %194 : vector<1x128xf32> to vector<8x128xf32>
    %196 = arith.select %191, %193, %195 : vector<8x128xi1>, vector<8x128xf32>
    %197 = vector.shape_cast %12 : vector<8x1xi1> to vector<8x1xi1>
    %198 = vector.broadcast %197 : vector<8x1xi1> to vector<8x128xi1>
    %199 = vector.shape_cast %167 : vector<1x128xf32> to vector<1x128xf32>
    %200 = vector.broadcast %199 : vector<1x128xf32> to vector<8x128xf32>
    %201 = vector.shape_cast %169 : vector<1x128xf32> to vector<1x128xf32>
    %202 = vector.broadcast %201 : vector<1x128xf32> to vector<8x128xf32>
    %203 = arith.select %198, %200, %202 : vector<8x128xi1>, vector<8x128xf32>
    %204 = vector.shape_cast %12 : vector<8x1xi1> to vector<8x1xi1>
    %205 = vector.broadcast %204 : vector<8x1xi1> to vector<8x128xi1>
    %206 = vector.shape_cast %168 : vector<1x128xf32> to vector<1x128xf32>
    %207 = vector.broadcast %206 : vector<1x128xf32> to vector<8x128xf32>
    %208 = vector.shape_cast %170 : vector<1x128xf32> to vector<1x128xf32>
    %209 = vector.broadcast %208 : vector<1x128xf32> to vector<8x128xf32>
    %210 = arith.select %205, %207, %209 : vector<8x128xi1>, vector<8x128xf32>
    %211 = arith.mulf %189, %157 : vector<8x128xf32>
    %212 = arith.mulf %196, %164 : vector<8x128xf32>
    %213 = arith.subf %211, %212 : vector<8x128xf32>
    %214 = arith.mulf %203, %177 : vector<8x128xf32>
    %215 = arith.addf %213, %214 : vector<8x128xf32>
    %216 = arith.mulf %210, %182 : vector<8x128xf32>
    %217 = arith.subf %215, %216 : vector<8x128xf32>
    %218 = arith.mulf %189, %164 : vector<8x128xf32>
    %219 = arith.mulf %196, %157 : vector<8x128xf32>
    %220 = arith.addf %218, %219 : vector<8x128xf32>
    %221 = arith.mulf %203, %182 : vector<8x128xf32>
    %222 = arith.addf %220, %221 : vector<8x128xf32>
    %223 = arith.mulf %210, %177 : vector<8x128xf32>
    %224 = arith.addf %222, %223 : vector<8x128xf32>
    %c6_i32_27 = arith.constant 6 : i32
    %225 = tpu.dynamic_rotate %217 by %c6_i32_27 dim 0 : vector<8x128xf32>, i32 -> vector<8x128xf32>
    %c2_i32_28 = arith.constant 2 : i32
    %226 = tpu.dynamic_rotate %217 by %c2_i32_28 dim 0 : vector<8x128xf32>, i32 -> vector<8x128xf32>
    %227 = vector.shape_cast %20 : vector<8x1xi1> to vector<8x1xi1>
    %228 = vector.broadcast %227 : vector<8x1xi1> to vector<8x128xi1>
    %229 = arith.select %228, %225, %226 : vector<8x128xi1>, vector<8x128xf32>
    %c6_i32_29 = arith.constant 6 : i32
    %230 = tpu.dynamic_rotate %224 by %c6_i32_29 dim 0 : vector<8x128xf32>, i32 -> vector<8x128xf32>
    %c2_i32_30 = arith.constant 2 : i32
    %231 = tpu.dynamic_rotate %224 by %c2_i32_30 dim 0 : vector<8x128xf32>, i32 -> vector<8x128xf32>
    %232 = vector.shape_cast %20 : vector<8x1xi1> to vector<8x1xi1>
    %233 = vector.broadcast %232 : vector<8x1xi1> to vector<8x128xi1>
    %234 = arith.select %233, %230, %231 : vector<8x128xi1>, vector<8x128xf32>
    %235 = vector.shape_cast %16 : vector<8x1xi1> to vector<8x1xi1>
    %236 = vector.broadcast %235 : vector<8x1xi1> to vector<8x128xi1>
    %237 = arith.select %236, %229, %217 : vector<8x128xi1>, vector<8x128xf32>
    %238 = vector.shape_cast %16 : vector<8x1xi1> to vector<8x1xi1>
    %239 = vector.broadcast %238 : vector<8x1xi1> to vector<8x128xi1>
    %240 = arith.select %239, %234, %224 : vector<8x128xi1>, vector<8x128xf32>
    %c7_i32_31 = arith.constant 7 : i32
    %241 = tpu.dynamic_rotate %237 by %c7_i32_31 dim 0 : vector<8x128xf32>, i32 -> vector<8x128xf32>
    %c1_i32_32 = arith.constant 1 : i32
    %242 = tpu.dynamic_rotate %237 by %c1_i32_32 dim 0 : vector<8x128xf32>, i32 -> vector<8x128xf32>
    %243 = vector.shape_cast %28 : vector<8x1xi1> to vector<8x1xi1>
    %244 = vector.broadcast %243 : vector<8x1xi1> to vector<8x128xi1>
    %245 = arith.select %244, %241, %242 : vector<8x128xi1>, vector<8x128xf32>
    %c7_i32_33 = arith.constant 7 : i32
    %246 = tpu.dynamic_rotate %240 by %c7_i32_33 dim 0 : vector<8x128xf32>, i32 -> vector<8x128xf32>
    %c1_i32_34 = arith.constant 1 : i32
    %247 = tpu.dynamic_rotate %240 by %c1_i32_34 dim 0 : vector<8x128xf32>, i32 -> vector<8x128xf32>
    %248 = vector.shape_cast %28 : vector<8x1xi1> to vector<8x1xi1>
    %249 = vector.broadcast %248 : vector<8x1xi1> to vector<8x128xi1>
    %250 = arith.select %249, %246, %247 : vector<8x128xi1>, vector<8x128xf32>
    %251 = vector.shape_cast %24 : vector<8x1xi1> to vector<8x1xi1>
    %252 = vector.broadcast %251 : vector<8x1xi1> to vector<8x128xi1>
    %253 = arith.select %252, %245, %237 : vector<8x128xi1>, vector<8x128xf32>
    %254 = vector.shape_cast %24 : vector<8x1xi1> to vector<8x1xi1>
    %255 = vector.broadcast %254 : vector<8x1xi1> to vector<8x128xi1>
    %256 = arith.select %255, %250, %240 : vector<8x128xi1>, vector<8x128xf32>
    %c4_i32_35 = arith.constant 4 : i32
    %257 = tpu.dynamic_rotate %253 by %c4_i32_35 dim 0 : vector<8x128xf32>, i32 -> vector<8x128xf32>
    %c4_i32_36 = arith.constant 4 : i32
    %258 = tpu.dynamic_rotate %253 by %c4_i32_36 dim 0 : vector<8x128xf32>, i32 -> vector<8x128xf32>
    %259 = vector.shape_cast %36 : vector<8x1xi1> to vector<8x1xi1>
    %260 = vector.broadcast %259 : vector<8x1xi1> to vector<8x128xi1>
    %261 = arith.select %260, %257, %258 : vector<8x128xi1>, vector<8x128xf32>
    %c4_i32_37 = arith.constant 4 : i32
    %262 = tpu.dynamic_rotate %256 by %c4_i32_37 dim 0 : vector<8x128xf32>, i32 -> vector<8x128xf32>
    %c4_i32_38 = arith.constant 4 : i32
    %263 = tpu.dynamic_rotate %256 by %c4_i32_38 dim 0 : vector<8x128xf32>, i32 -> vector<8x128xf32>
    %264 = vector.shape_cast %36 : vector<8x1xi1> to vector<8x1xi1>
    %265 = vector.broadcast %264 : vector<8x1xi1> to vector<8x128xi1>
    %266 = arith.select %265, %262, %263 : vector<8x128xi1>, vector<8x128xf32>
    %267 = vector.shape_cast %32 : vector<8x1xi1> to vector<8x1xi1>
    %268 = vector.broadcast %267 : vector<8x1xi1> to vector<8x128xi1>
    %269 = arith.select %268, %261, %253 : vector<8x128xi1>, vector<8x128xf32>
    %270 = vector.shape_cast %32 : vector<8x1xi1> to vector<8x1xi1>
    %271 = vector.broadcast %270 : vector<8x1xi1> to vector<8x128xi1>
    %272 = arith.select %271, %266, %256 : vector<8x128xi1>, vector<8x128xf32>
    %c1 = arith.constant 1 : index
    %c0_39 = arith.constant 0 : index
    %c0_40 = arith.constant 0 : index
    %273 = vector.load %arg1[%c1, %c0_39, %c0_40] : memref<2x24x128xf32, #tpu.memory_space<vmem>>, vector<1x24x128xf32>
    %274 = vector.shape_cast %273 : vector<1x24x128xf32> to vector<24x128xf32>
    %275 = vector.extract_strided_slice %274 {offsets = [0, 0], sizes = [1, 128], strides = [1, 1]} : vector<24x128xf32> to vector<1x128xf32>
    %276 = vector.extract_strided_slice %274 {offsets = [1, 0], sizes = [1, 128], strides = [1, 1]} : vector<24x128xf32> to vector<1x128xf32>
    %277 = vector.extract_strided_slice %274 {offsets = [2, 0], sizes = [1, 128], strides = [1, 1]} : vector<24x128xf32> to vector<1x128xf32>
    %278 = vector.extract_strided_slice %274 {offsets = [3, 0], sizes = [1, 128], strides = [1, 1]} : vector<24x128xf32> to vector<1x128xf32>
    %279 = vector.extract_strided_slice %274 {offsets = [4, 0], sizes = [1, 128], strides = [1, 1]} : vector<24x128xf32> to vector<1x128xf32>
    %280 = vector.extract_strided_slice %274 {offsets = [5, 0], sizes = [1, 128], strides = [1, 1]} : vector<24x128xf32> to vector<1x128xf32>
    %281 = vector.extract_strided_slice %274 {offsets = [6, 0], sizes = [1, 128], strides = [1, 1]} : vector<24x128xf32> to vector<1x128xf32>
    %282 = vector.extract_strided_slice %274 {offsets = [7, 0], sizes = [1, 128], strides = [1, 1]} : vector<24x128xf32> to vector<1x128xf32>
    %c4_i32_41 = arith.constant 4 : i32
    %283 = tpu.dynamic_rotate %269 by %c4_i32_41 dim 0 : vector<8x128xf32>, i32 -> vector<8x128xf32>
    %c4_i32_42 = arith.constant 4 : i32
    %284 = tpu.dynamic_rotate %269 by %c4_i32_42 dim 0 : vector<8x128xf32>, i32 -> vector<8x128xf32>
    %285 = vector.shape_cast %4 : vector<8x1xi1> to vector<8x1xi1>
    %286 = vector.broadcast %285 : vector<8x1xi1> to vector<8x128xi1>
    %287 = arith.select %286, %283, %284 : vector<8x128xi1>, vector<8x128xf32>
    %c4_i32_43 = arith.constant 4 : i32
    %288 = tpu.dynamic_rotate %272 by %c4_i32_43 dim 0 : vector<8x128xf32>, i32 -> vector<8x128xf32>
    %c4_i32_44 = arith.constant 4 : i32
    %289 = tpu.dynamic_rotate %272 by %c4_i32_44 dim 0 : vector<8x128xf32>, i32 -> vector<8x128xf32>
    %290 = vector.shape_cast %4 : vector<8x1xi1> to vector<8x1xi1>
    %291 = vector.broadcast %290 : vector<8x1xi1> to vector<8x128xi1>
    %292 = arith.select %291, %288, %289 : vector<8x128xi1>, vector<8x128xf32>
    %293 = vector.shape_cast %4 : vector<8x1xi1> to vector<8x1xi1>
    %294 = vector.broadcast %293 : vector<8x1xi1> to vector<8x128xi1>
    %295 = vector.shape_cast %275 : vector<1x128xf32> to vector<1x128xf32>
    %296 = vector.broadcast %295 : vector<1x128xf32> to vector<8x128xf32>
    %297 = vector.shape_cast %281 : vector<1x128xf32> to vector<1x128xf32>
    %298 = vector.broadcast %297 : vector<1x128xf32> to vector<8x128xf32>
    %299 = arith.select %294, %296, %298 : vector<8x128xi1>, vector<8x128xf32>
    %300 = vector.shape_cast %4 : vector<8x1xi1> to vector<8x1xi1>
    %301 = vector.broadcast %300 : vector<8x1xi1> to vector<8x128xi1>
    %302 = vector.shape_cast %276 : vector<1x128xf32> to vector<1x128xf32>
    %303 = vector.broadcast %302 : vector<1x128xf32> to vector<8x128xf32>
    %304 = vector.shape_cast %282 : vector<1x128xf32> to vector<1x128xf32>
    %305 = vector.broadcast %304 : vector<1x128xf32> to vector<8x128xf32>
    %306 = arith.select %301, %303, %305 : vector<8x128xi1>, vector<8x128xf32>
    %307 = vector.shape_cast %4 : vector<8x1xi1> to vector<8x1xi1>
    %308 = vector.broadcast %307 : vector<8x1xi1> to vector<8x128xi1>
    %309 = vector.shape_cast %277 : vector<1x128xf32> to vector<1x128xf32>
    %310 = vector.broadcast %309 : vector<1x128xf32> to vector<8x128xf32>
    %311 = vector.shape_cast %279 : vector<1x128xf32> to vector<1x128xf32>
    %312 = vector.broadcast %311 : vector<1x128xf32> to vector<8x128xf32>
    %313 = arith.select %308, %310, %312 : vector<8x128xi1>, vector<8x128xf32>
    %314 = vector.shape_cast %4 : vector<8x1xi1> to vector<8x1xi1>
    %315 = vector.broadcast %314 : vector<8x1xi1> to vector<8x128xi1>
    %316 = vector.shape_cast %278 : vector<1x128xf32> to vector<1x128xf32>
    %317 = vector.broadcast %316 : vector<1x128xf32> to vector<8x128xf32>
    %318 = vector.shape_cast %280 : vector<1x128xf32> to vector<1x128xf32>
    %319 = vector.broadcast %318 : vector<1x128xf32> to vector<8x128xf32>
    %320 = arith.select %315, %317, %319 : vector<8x128xi1>, vector<8x128xf32>
    %321 = arith.mulf %299, %269 : vector<8x128xf32>
    %322 = arith.mulf %306, %272 : vector<8x128xf32>
    %323 = arith.subf %321, %322 : vector<8x128xf32>
    %324 = arith.mulf %313, %287 : vector<8x128xf32>
    %325 = arith.addf %323, %324 : vector<8x128xf32>
    %326 = arith.mulf %320, %292 : vector<8x128xf32>
    %327 = arith.subf %325, %326 : vector<8x128xf32>
    %328 = arith.mulf %299, %272 : vector<8x128xf32>
    %329 = arith.mulf %306, %269 : vector<8x128xf32>
    %330 = arith.addf %328, %329 : vector<8x128xf32>
    %331 = arith.mulf %313, %292 : vector<8x128xf32>
    %332 = arith.addf %330, %331 : vector<8x128xf32>
    %333 = arith.mulf %320, %287 : vector<8x128xf32>
    %334 = arith.addf %332, %333 : vector<8x128xf32>
    %335 = vector.extract_strided_slice %274 {offsets = [8, 0], sizes = [1, 128], strides = [1, 1]} : vector<24x128xf32> to vector<1x128xf32>
    %336 = vector.extract_strided_slice %274 {offsets = [9, 0], sizes = [1, 128], strides = [1, 1]} : vector<24x128xf32> to vector<1x128xf32>
    %337 = vector.extract_strided_slice %274 {offsets = [10, 0], sizes = [1, 128], strides = [1, 1]} : vector<24x128xf32> to vector<1x128xf32>
    %338 = vector.extract_strided_slice %274 {offsets = [11, 0], sizes = [1, 128], strides = [1, 1]} : vector<24x128xf32> to vector<1x128xf32>
    %339 = vector.extract_strided_slice %274 {offsets = [12, 0], sizes = [1, 128], strides = [1, 1]} : vector<24x128xf32> to vector<1x128xf32>
    %340 = vector.extract_strided_slice %274 {offsets = [13, 0], sizes = [1, 128], strides = [1, 1]} : vector<24x128xf32> to vector<1x128xf32>
    %341 = vector.extract_strided_slice %274 {offsets = [14, 0], sizes = [1, 128], strides = [1, 1]} : vector<24x128xf32> to vector<1x128xf32>
    %342 = vector.extract_strided_slice %274 {offsets = [15, 0], sizes = [1, 128], strides = [1, 1]} : vector<24x128xf32> to vector<1x128xf32>
    %c6_i32_45 = arith.constant 6 : i32
    %343 = tpu.dynamic_rotate %327 by %c6_i32_45 dim 0 : vector<8x128xf32>, i32 -> vector<8x128xf32>
    %c2_i32_46 = arith.constant 2 : i32
    %344 = tpu.dynamic_rotate %327 by %c2_i32_46 dim 0 : vector<8x128xf32>, i32 -> vector<8x128xf32>
    %345 = vector.shape_cast %8 : vector<8x1xi1> to vector<8x1xi1>
    %346 = vector.broadcast %345 : vector<8x1xi1> to vector<8x128xi1>
    %347 = arith.select %346, %343, %344 : vector<8x128xi1>, vector<8x128xf32>
    %c6_i32_47 = arith.constant 6 : i32
    %348 = tpu.dynamic_rotate %334 by %c6_i32_47 dim 0 : vector<8x128xf32>, i32 -> vector<8x128xf32>
    %c2_i32_48 = arith.constant 2 : i32
    %349 = tpu.dynamic_rotate %334 by %c2_i32_48 dim 0 : vector<8x128xf32>, i32 -> vector<8x128xf32>
    %350 = vector.shape_cast %8 : vector<8x1xi1> to vector<8x1xi1>
    %351 = vector.broadcast %350 : vector<8x1xi1> to vector<8x128xi1>
    %352 = arith.select %351, %348, %349 : vector<8x128xi1>, vector<8x128xf32>
    %353 = vector.shape_cast %8 : vector<8x1xi1> to vector<8x1xi1>
    %354 = vector.broadcast %353 : vector<8x1xi1> to vector<8x128xi1>
    %355 = vector.shape_cast %335 : vector<1x128xf32> to vector<1x128xf32>
    %356 = vector.broadcast %355 : vector<1x128xf32> to vector<8x128xf32>
    %357 = vector.shape_cast %341 : vector<1x128xf32> to vector<1x128xf32>
    %358 = vector.broadcast %357 : vector<1x128xf32> to vector<8x128xf32>
    %359 = arith.select %354, %356, %358 : vector<8x128xi1>, vector<8x128xf32>
    %360 = vector.shape_cast %8 : vector<8x1xi1> to vector<8x1xi1>
    %361 = vector.broadcast %360 : vector<8x1xi1> to vector<8x128xi1>
    %362 = vector.shape_cast %336 : vector<1x128xf32> to vector<1x128xf32>
    %363 = vector.broadcast %362 : vector<1x128xf32> to vector<8x128xf32>
    %364 = vector.shape_cast %342 : vector<1x128xf32> to vector<1x128xf32>
    %365 = vector.broadcast %364 : vector<1x128xf32> to vector<8x128xf32>
    %366 = arith.select %361, %363, %365 : vector<8x128xi1>, vector<8x128xf32>
    %367 = vector.shape_cast %8 : vector<8x1xi1> to vector<8x1xi1>
    %368 = vector.broadcast %367 : vector<8x1xi1> to vector<8x128xi1>
    %369 = vector.shape_cast %337 : vector<1x128xf32> to vector<1x128xf32>
    %370 = vector.broadcast %369 : vector<1x128xf32> to vector<8x128xf32>
    %371 = vector.shape_cast %339 : vector<1x128xf32> to vector<1x128xf32>
    %372 = vector.broadcast %371 : vector<1x128xf32> to vector<8x128xf32>
    %373 = arith.select %368, %370, %372 : vector<8x128xi1>, vector<8x128xf32>
    %374 = vector.shape_cast %8 : vector<8x1xi1> to vector<8x1xi1>
    %375 = vector.broadcast %374 : vector<8x1xi1> to vector<8x128xi1>
    %376 = vector.shape_cast %338 : vector<1x128xf32> to vector<1x128xf32>
    %377 = vector.broadcast %376 : vector<1x128xf32> to vector<8x128xf32>
    %378 = vector.shape_cast %340 : vector<1x128xf32> to vector<1x128xf32>
    %379 = vector.broadcast %378 : vector<1x128xf32> to vector<8x128xf32>
    %380 = arith.select %375, %377, %379 : vector<8x128xi1>, vector<8x128xf32>
    %381 = arith.mulf %359, %327 : vector<8x128xf32>
    %382 = arith.mulf %366, %334 : vector<8x128xf32>
    %383 = arith.subf %381, %382 : vector<8x128xf32>
    %384 = arith.mulf %373, %347 : vector<8x128xf32>
    %385 = arith.addf %383, %384 : vector<8x128xf32>
    %386 = arith.mulf %380, %352 : vector<8x128xf32>
    %387 = arith.subf %385, %386 : vector<8x128xf32>
    %388 = arith.mulf %359, %334 : vector<8x128xf32>
    %389 = arith.mulf %366, %327 : vector<8x128xf32>
    %390 = arith.addf %388, %389 : vector<8x128xf32>
    %391 = arith.mulf %373, %352 : vector<8x128xf32>
    %392 = arith.addf %390, %391 : vector<8x128xf32>
    %393 = arith.mulf %380, %347 : vector<8x128xf32>
    %394 = arith.addf %392, %393 : vector<8x128xf32>
    %395 = vector.extract_strided_slice %274 {offsets = [16, 0], sizes = [1, 128], strides = [1, 1]} : vector<24x128xf32> to vector<1x128xf32>
    %396 = vector.extract_strided_slice %274 {offsets = [17, 0], sizes = [1, 128], strides = [1, 1]} : vector<24x128xf32> to vector<1x128xf32>
    %397 = vector.extract_strided_slice %274 {offsets = [18, 0], sizes = [1, 128], strides = [1, 1]} : vector<24x128xf32> to vector<1x128xf32>
    %398 = vector.extract_strided_slice %274 {offsets = [19, 0], sizes = [1, 128], strides = [1, 1]} : vector<24x128xf32> to vector<1x128xf32>
    %399 = vector.extract_strided_slice %274 {offsets = [20, 0], sizes = [1, 128], strides = [1, 1]} : vector<24x128xf32> to vector<1x128xf32>
    %400 = vector.extract_strided_slice %274 {offsets = [21, 0], sizes = [1, 128], strides = [1, 1]} : vector<24x128xf32> to vector<1x128xf32>
    %401 = vector.extract_strided_slice %274 {offsets = [22, 0], sizes = [1, 128], strides = [1, 1]} : vector<24x128xf32> to vector<1x128xf32>
    %402 = vector.extract_strided_slice %274 {offsets = [23, 0], sizes = [1, 128], strides = [1, 1]} : vector<24x128xf32> to vector<1x128xf32>
    %c7_i32_49 = arith.constant 7 : i32
    %403 = tpu.dynamic_rotate %387 by %c7_i32_49 dim 0 : vector<8x128xf32>, i32 -> vector<8x128xf32>
    %c1_i32_50 = arith.constant 1 : i32
    %404 = tpu.dynamic_rotate %387 by %c1_i32_50 dim 0 : vector<8x128xf32>, i32 -> vector<8x128xf32>
    %405 = vector.shape_cast %12 : vector<8x1xi1> to vector<8x1xi1>
    %406 = vector.broadcast %405 : vector<8x1xi1> to vector<8x128xi1>
    %407 = arith.select %406, %403, %404 : vector<8x128xi1>, vector<8x128xf32>
    %c7_i32_51 = arith.constant 7 : i32
    %408 = tpu.dynamic_rotate %394 by %c7_i32_51 dim 0 : vector<8x128xf32>, i32 -> vector<8x128xf32>
    %c1_i32_52 = arith.constant 1 : i32
    %409 = tpu.dynamic_rotate %394 by %c1_i32_52 dim 0 : vector<8x128xf32>, i32 -> vector<8x128xf32>
    %410 = vector.shape_cast %12 : vector<8x1xi1> to vector<8x1xi1>
    %411 = vector.broadcast %410 : vector<8x1xi1> to vector<8x128xi1>
    %412 = arith.select %411, %408, %409 : vector<8x128xi1>, vector<8x128xf32>
    %413 = vector.shape_cast %12 : vector<8x1xi1> to vector<8x1xi1>
    %414 = vector.broadcast %413 : vector<8x1xi1> to vector<8x128xi1>
    %415 = vector.shape_cast %395 : vector<1x128xf32> to vector<1x128xf32>
    %416 = vector.broadcast %415 : vector<1x128xf32> to vector<8x128xf32>
    %417 = vector.shape_cast %401 : vector<1x128xf32> to vector<1x128xf32>
    %418 = vector.broadcast %417 : vector<1x128xf32> to vector<8x128xf32>
    %419 = arith.select %414, %416, %418 : vector<8x128xi1>, vector<8x128xf32>
    %420 = vector.shape_cast %12 : vector<8x1xi1> to vector<8x1xi1>
    %421 = vector.broadcast %420 : vector<8x1xi1> to vector<8x128xi1>
    %422 = vector.shape_cast %396 : vector<1x128xf32> to vector<1x128xf32>
    %423 = vector.broadcast %422 : vector<1x128xf32> to vector<8x128xf32>
    %424 = vector.shape_cast %402 : vector<1x128xf32> to vector<1x128xf32>
    %425 = vector.broadcast %424 : vector<1x128xf32> to vector<8x128xf32>
    %426 = arith.select %421, %423, %425 : vector<8x128xi1>, vector<8x128xf32>
    %427 = vector.shape_cast %12 : vector<8x1xi1> to vector<8x1xi1>
    %428 = vector.broadcast %427 : vector<8x1xi1> to vector<8x128xi1>
    %429 = vector.shape_cast %397 : vector<1x128xf32> to vector<1x128xf32>
    %430 = vector.broadcast %429 : vector<1x128xf32> to vector<8x128xf32>
    %431 = vector.shape_cast %399 : vector<1x128xf32> to vector<1x128xf32>
    %432 = vector.broadcast %431 : vector<1x128xf32> to vector<8x128xf32>
    %433 = arith.select %428, %430, %432 : vector<8x128xi1>, vector<8x128xf32>
    %434 = vector.shape_cast %12 : vector<8x1xi1> to vector<8x1xi1>
    %435 = vector.broadcast %434 : vector<8x1xi1> to vector<8x128xi1>
    %436 = vector.shape_cast %398 : vector<1x128xf32> to vector<1x128xf32>
    %437 = vector.broadcast %436 : vector<1x128xf32> to vector<8x128xf32>
    %438 = vector.shape_cast %400 : vector<1x128xf32> to vector<1x128xf32>
    %439 = vector.broadcast %438 : vector<1x128xf32> to vector<8x128xf32>
    %440 = arith.select %435, %437, %439 : vector<8x128xi1>, vector<8x128xf32>
    %441 = arith.mulf %419, %387 : vector<8x128xf32>
    %442 = arith.mulf %426, %394 : vector<8x128xf32>
    %443 = arith.subf %441, %442 : vector<8x128xf32>
    %444 = arith.mulf %433, %407 : vector<8x128xf32>
    %445 = arith.addf %443, %444 : vector<8x128xf32>
    %446 = arith.mulf %440, %412 : vector<8x128xf32>
    %447 = arith.subf %445, %446 : vector<8x128xf32>
    %448 = arith.mulf %419, %394 : vector<8x128xf32>
    %449 = arith.mulf %426, %387 : vector<8x128xf32>
    %450 = arith.addf %448, %449 : vector<8x128xf32>
    %451 = arith.mulf %433, %412 : vector<8x128xf32>
    %452 = arith.addf %450, %451 : vector<8x128xf32>
    %453 = arith.mulf %440, %407 : vector<8x128xf32>
    %454 = arith.addf %452, %453 : vector<8x128xf32>
    %c6_i32_53 = arith.constant 6 : i32
    %455 = tpu.dynamic_rotate %447 by %c6_i32_53 dim 0 : vector<8x128xf32>, i32 -> vector<8x128xf32>
    %c2_i32_54 = arith.constant 2 : i32
    %456 = tpu.dynamic_rotate %447 by %c2_i32_54 dim 0 : vector<8x128xf32>, i32 -> vector<8x128xf32>
    %457 = vector.shape_cast %20 : vector<8x1xi1> to vector<8x1xi1>
    %458 = vector.broadcast %457 : vector<8x1xi1> to vector<8x128xi1>
    %459 = arith.select %458, %455, %456 : vector<8x128xi1>, vector<8x128xf32>
    %c6_i32_55 = arith.constant 6 : i32
    %460 = tpu.dynamic_rotate %454 by %c6_i32_55 dim 0 : vector<8x128xf32>, i32 -> vector<8x128xf32>
    %c2_i32_56 = arith.constant 2 : i32
    %461 = tpu.dynamic_rotate %454 by %c2_i32_56 dim 0 : vector<8x128xf32>, i32 -> vector<8x128xf32>
    %462 = vector.shape_cast %20 : vector<8x1xi1> to vector<8x1xi1>
    %463 = vector.broadcast %462 : vector<8x1xi1> to vector<8x128xi1>
    %464 = arith.select %463, %460, %461 : vector<8x128xi1>, vector<8x128xf32>
    %465 = vector.shape_cast %16 : vector<8x1xi1> to vector<8x1xi1>
    %466 = vector.broadcast %465 : vector<8x1xi1> to vector<8x128xi1>
    %467 = arith.select %466, %459, %447 : vector<8x128xi1>, vector<8x128xf32>
    %468 = vector.shape_cast %16 : vector<8x1xi1> to vector<8x1xi1>
    %469 = vector.broadcast %468 : vector<8x1xi1> to vector<8x128xi1>
    %470 = arith.select %469, %464, %454 : vector<8x128xi1>, vector<8x128xf32>
    %c7_i32_57 = arith.constant 7 : i32
    %471 = tpu.dynamic_rotate %467 by %c7_i32_57 dim 0 : vector<8x128xf32>, i32 -> vector<8x128xf32>
    %c1_i32_58 = arith.constant 1 : i32
    %472 = tpu.dynamic_rotate %467 by %c1_i32_58 dim 0 : vector<8x128xf32>, i32 -> vector<8x128xf32>
    %473 = vector.shape_cast %28 : vector<8x1xi1> to vector<8x1xi1>
    %474 = vector.broadcast %473 : vector<8x1xi1> to vector<8x128xi1>
    %475 = arith.select %474, %471, %472 : vector<8x128xi1>, vector<8x128xf32>
    %c7_i32_59 = arith.constant 7 : i32
    %476 = tpu.dynamic_rotate %470 by %c7_i32_59 dim 0 : vector<8x128xf32>, i32 -> vector<8x128xf32>
    %c1_i32_60 = arith.constant 1 : i32
    %477 = tpu.dynamic_rotate %470 by %c1_i32_60 dim 0 : vector<8x128xf32>, i32 -> vector<8x128xf32>
    %478 = vector.shape_cast %28 : vector<8x1xi1> to vector<8x1xi1>
    %479 = vector.broadcast %478 : vector<8x1xi1> to vector<8x128xi1>
    %480 = arith.select %479, %476, %477 : vector<8x128xi1>, vector<8x128xf32>
    %481 = vector.shape_cast %24 : vector<8x1xi1> to vector<8x1xi1>
    %482 = vector.broadcast %481 : vector<8x1xi1> to vector<8x128xi1>
    %483 = arith.select %482, %475, %467 : vector<8x128xi1>, vector<8x128xf32>
    %484 = vector.shape_cast %24 : vector<8x1xi1> to vector<8x1xi1>
    %485 = vector.broadcast %484 : vector<8x1xi1> to vector<8x128xi1>
    %486 = arith.select %485, %480, %470 : vector<8x128xi1>, vector<8x128xf32>
    %c4_i32_61 = arith.constant 4 : i32
    %487 = tpu.dynamic_rotate %483 by %c4_i32_61 dim 0 : vector<8x128xf32>, i32 -> vector<8x128xf32>
    %c4_i32_62 = arith.constant 4 : i32
    %488 = tpu.dynamic_rotate %483 by %c4_i32_62 dim 0 : vector<8x128xf32>, i32 -> vector<8x128xf32>
    %489 = vector.shape_cast %36 : vector<8x1xi1> to vector<8x1xi1>
    %490 = vector.broadcast %489 : vector<8x1xi1> to vector<8x128xi1>
    %491 = arith.select %490, %487, %488 : vector<8x128xi1>, vector<8x128xf32>
    %c4_i32_63 = arith.constant 4 : i32
    %492 = tpu.dynamic_rotate %486 by %c4_i32_63 dim 0 : vector<8x128xf32>, i32 -> vector<8x128xf32>
    %c4_i32_64 = arith.constant 4 : i32
    %493 = tpu.dynamic_rotate %486 by %c4_i32_64 dim 0 : vector<8x128xf32>, i32 -> vector<8x128xf32>
    %494 = vector.shape_cast %36 : vector<8x1xi1> to vector<8x1xi1>
    %495 = vector.broadcast %494 : vector<8x1xi1> to vector<8x128xi1>
    %496 = arith.select %495, %492, %493 : vector<8x128xi1>, vector<8x128xf32>
    %497 = vector.shape_cast %32 : vector<8x1xi1> to vector<8x1xi1>
    %498 = vector.broadcast %497 : vector<8x1xi1> to vector<8x128xi1>
    %499 = arith.select %498, %491, %483 : vector<8x128xi1>, vector<8x128xf32>
    %500 = vector.shape_cast %32 : vector<8x1xi1> to vector<8x1xi1>
    %501 = vector.broadcast %500 : vector<8x1xi1> to vector<8x128xi1>
    %502 = arith.select %501, %496, %486 : vector<8x128xi1>, vector<8x128xf32>
    %c0_65 = arith.constant 0 : index
    %c0_66 = arith.constant 0 : index
    %503 = vector.load %arg2[%c0_65, %c0_66] : memref<8x128xf32, #tpu.memory_space<vmem>>, vector<8x128xf32>
    tpu.vector_store %arg2[%c0_65, %c0_66], %499 {strides = array<i32>} : memref<8x128xf32, #tpu.memory_space<vmem>>, vector<8x128xf32>,
    %c0_67 = arith.constant 0 : index
    %c0_68 = arith.constant 0 : index
    %504 = vector.load %arg3[%c0_67, %c0_68] : memref<8x128xf32, #tpu.memory_space<vmem>>, vector<8x128xf32>
    tpu.vector_store %arg3[%c0_67, %c0_68], %502 {strides = array<i32>} : memref<8x128xf32, #tpu.memory_space<vmem>>, vector<8x128xf32>,
    return
  }
  func.func @transform_0(%arg0: i32) -> (i32, i32, i32) {
    %c0_i32 = arith.constant 0 : i32
    %c0_i32_0 = arith.constant 0 : i32
    %c0_i32_1 = arith.constant 0 : i32
    return %c0_i32, %c0_i32_0, %arg0 : i32, i32, i32
  }
  func.func @transform_1(%arg0: i32) -> (i32, i32) {
    %c0_i32 = arith.constant 0 : i32
    %c0_i32_0 = arith.constant 0 : i32
    return %c0_i32, %arg0 : i32, i32
  }
  func.func @transform_2(%arg0: i32) -> (i32, i32) {
    %c0_i32 = arith.constant 0 : i32
    %c0_i32_0 = arith.constant 0 : i32
    return %c0_i32, %arg0 : i32, i32
  }
}

</mosaic_0001>

<llo_original>
// kernel: tpu_custom_call.1
$region0: #{tpu_custom_call.1}
  #allocation0 [shape = 'u32[]', space=smem, size = 0x4, offset = 0x4, fixed_abs, tag = 'smem constant byte address 0x4 - core index']
  #allocation1 [shape = 'u32[72,128]{1,0:T(1,128)}', space=vmem, size = 0x9000, scoped, tag = 'internal scratch']
  %s0 = inlined_call_operand.hbm [shape: f32[2,24,128], index: 0, kind: input, shape index: {}]
  %s1 = inlined_call_operand.hbm [shape: f32[8,128], index: 1, kind: output, shape index: {0}]
  %s2 = inlined_call_operand.hbm [shape: f32[8,128], index: 2, kind: output, shape index: {1}]
  %3 = xla_tuple %s1, %s2
  %s4 = sld [smem:[#allocation0]]
  $region26: #{tpu_custom_call.1} parent=0
    _
  %s6 = ssub.s32 1, %s4
  %s7 = scalar_select 0, %s6, %s4
  $region1: #{tpu_custom_call.1} parent=0
    #allocation2 [shape = 'u8[24576]{0}', space=vmem, size = 0x6000, scoped, tag = 'input window, operand 0, single buffered']
    #allocation3 [shape = 's32[1]{0}', space=sflag, size = 0x4, scoped, tag = 'scoped memory for tpu_custom_call.1']
    #allocation4 [shape = 's32[1]{0}', space=sflag, size = 0x4, scoped, tag = 'scoped memory for tpu_custom_call.1']
    #allocation5 [shape = 'u8[4096]{0}', space=vmem, size = 0x1000, scoped, tag = 'output window, operand 0, single buffered']
    #allocation6 [shape = 'u8[4096]{0}', space=vmem, size = 0x1000, scoped, tag = 'output window, operand 1, single buffered']
    #allocation7 [shape = 's32[1]{0}', space=sflag, size = 0x4, scoped, tag = 'scoped memory for tpu_custom_call.1']
    %8 = vsyncpa [#allocation3], 0
    %9 = vsyncpa [#allocation4], 0
    %10 = vsyncpa [#allocation7], 0
    // Predicated region
    $region2: #{tpu_custom_call.1} parent=1 // pred_check
      _
    $region3: #{tpu_custom_call.1} parent=1 // pred_check_branch
      %12 = sbr.rel (0) target = $region5
    $region4: #{tpu_custom_call.1} parent=1 // pred_region
      %14 = vsyncadd [#allocation3], 0
      %s15 = sshll.u32 %s0, 4
      %s16 = int_to_ptr.hbm [resolvable:$true] %s15
      %s17 = sshll.u32 [#allocation2], 4
      %s18 = int_to_ptr.vmem [resolvable:$true] %s17
      %23 = dma.hbm_to_vmem [thread:$0]  %s16, 768, %s18, [#allocation3], 128, 128, 8
    $region5: #{tpu_custom_call.1} parent=1 // pred_fallthru
      _
    // Predicated region
    $region6: #{tpu_custom_call.1} parent=1 // pred_check
      _
    $region7: #{tpu_custom_call.1} parent=1 // pred_check_branch
      %25 = sbr.rel (0) target = $region9
    $region8: #{tpu_custom_call.1} parent=1 // pred_region
      %27 = dma.done [#allocation3], 768
    $region9: #{tpu_custom_call.1} parent=1 // pred_fallthru
      _
    %v28 = vlaneseq
    %v29 = vshrl.u32 %v28, 7
    %v30 = vand.u32 %v29, 4
    %vm31 = vcmp.eq.s32.totalorder %v30, 0
    %v32 = vand.u32 %v29, 2
    %vm33 = vcmp.eq.s32.totalorder %v32, 0
    %v34 = vand.u32 %v29, 1
    %vm35 = vcmp.eq.s32.totalorder %v34, 0
    %vm36 = vcmp.ne.s32.totalorder %v30, 0
    %vm37 = vcmp.ne.s32.totalorder %v32, 0
    %vm38 = vcmp.ne.s32.totalorder %v34, 0
    %vm39 = vcmp.eq.s32.totalorder %v29, 0
    %v40 = vsel %vm39, 1, 0
    %v41 = vcvt.s32.f32 %v40
    %v42 = vld [vmem:[#allocation2] sm:$0xff]
    %v43 = vld [vmem:[#allocation2 + $0x8] sm:$0xff]
    %v44 = vld [vmem:[#allocation2 + $0x10] sm:$0xff]
    %v45 = vrot.slane %v41, 4
    %v46 = vsel %vm31, 1, 0
    %vm47 = vcmp.eq.s32.totalorder %v46, 1
    %v48 = vperm.slane %v42, 0
    %v49 = vperm.slane %v42, 6
    %v50 = vsel %vm47, %v48, %v49
    %v51 = vperm.slane %v42, 1
    %v52 = vperm.slane %v42, 7
    %v53 = vsel %vm47, %v51, %v52
    %v54 = vperm.slane %v42, 2
    %v55 = vperm.slane %v42, 4
    %v56 = vsel %vm47, %v54, %v55
    %v57 = vperm.slane %v42, 3
    %v58 = vperm.slane %v42, 5
    %v59 = vsel %vm47, %v57, %v58
    %v60 = vmul.f32 %v50, %v41
    %v61 = vmul.f32 %v53, 0.0
    %v62 = vsub.f32 %v60, %v61
    %v63 = vmul.f32 %v56, %v45
    %v64 = vadd.f32 %v62, %v63
    %v65 = vmul.f32 %v59, 0.0
    %v66 = vsub.f32 %v64, %v65
    %v67 = vmul.f32 %v50, 0.0
    %v68 = vmul.f32 %v53, %v41
    %v69 = vadd.f32 %v67, %v68
    %v70 = vmul.f32 %v56, 0.0
    %v71 = vadd.f32 %v69, %v70
    %v72 = vmul.f32 %v59, %v45
    %v73 = vadd.f32 %v71, %v72
    %v74 = vrot.slane %v66, 2
    %v75 = vrot.slane %v66, 6
    %v76 = vsel %vm33, 1, 0
    %vm77 = vcmp.eq.s32.totalorder %v76, 1
    %v78 = vsel %vm77, %v74, %v75
    %v79 = vrot.slane %v73, 2
    %v80 = vrot.slane %v73, 6
    %v81 = vsel %vm77, %v79, %v80
    %v82 = vperm.slane %v43, 0
    %v83 = vperm.slane %v43, 6
    %v84 = vsel %vm77, %v82, %v83
    %v85 = vperm.slane %v43, 1
    %v86 = vperm.slane %v43, 7
    %v87 = vsel %vm77, %v85, %v86
    %v88 = vperm.slane %v43, 2
    %v89 = vperm.slane %v43, 4
    %v90 = vsel %vm77, %v88, %v89
    %v91 = vperm.slane %v43, 3
    %v92 = vperm.slane %v43, 5
    %v93 = vsel %vm77, %v91, %v92
    %v94 = vmul.f32 %v84, %v66
    %v95 = vmul.f32 %v87, %v73
    %v96 = vsub.f32 %v94, %v95
    %v97 = vmul.f32 %v90, %v78
    %v98 = vadd.f32 %v96, %v97
    %v99 = vmul.f32 %v93, %v81
    %v100 = vsub.f32 %v98, %v99
    %v101 = vmul.f32 %v84, %v73
    %v102 = vmul.f32 %v87, %v66
    %v103 = vadd.f32 %v101, %v102
    %v104 = vmul.f32 %v90, %v81
    %v105 = vadd.f32 %v103, %v104
    %v106 = vmul.f32 %v93, %v78
    %v107 = vadd.f32 %v105, %v106
    %v108 = vrot.slane %v100, 1
    %v109 = vrot.slane %v100, 7
    %v110 = vsel %vm35, 1, 0
    %vm111 = vcmp.eq.s32.totalorder %v110, 1
    %v112 = vsel %vm111, %v108, %v109
    %v113 = vrot.slane %v107, 1
    %v114 = vrot.slane %v107, 7
    %v115 = vsel %vm111, %v113, %v114
    %v116 = vperm.slane %v44, 0
    %v117 = vperm.slane %v44, 6
    %v118 = vsel %vm111, %v116, %v117
    %v119 = vperm.slane %v44, 1
    %v120 = vperm.slane %v44, 7
    %v121 = vsel %vm111, %v119, %v120
    %v122 = vperm.slane %v44, 2
    %v123 = vperm.slane %v44, 4
    %v124 = vsel %vm111, %v122, %v123
    %v125 = vperm.slane %v44, 3
    %v126 = vperm.slane %v44, 5
    %v127 = vsel %vm111, %v125, %v126
    %v128 = vmul.f32 %v118, %v100
    %v129 = vmul.f32 %v121, %v107
    %v130 = vsub.f32 %v128, %v129
    %v131 = vmul.f32 %v124, %v112
    %v132 = vadd.f32 %v130, %v131
    %v133 = vmul.f32 %v127, %v115
    %v134 = vsub.f32 %v132, %v133
    %v135 = vmul.f32 %v118, %v107
    %v136 = vmul.f32 %v121, %v100
    %v137 = vadd.f32 %v135, %v136
    %v138 = vmul.f32 %v124, %v115
    %v139 = vadd.f32 %v137, %v138
    %v140 = vmul.f32 %v127, %v112
    %v141 = vadd.f32 %v139, %v140
    %v142 = vrot.slane %v134, 2
    %v143 = vrot.slane %v134, 6
    %v144 = vsel %vm77, %v142, %v143
    %v145 = vrot.slane %v141, 2
    %v146 = vrot.slane %v141, 6
    %v147 = vsel %vm77, %v145, %v146
    %v148 = vsel %vm36, 1, 0
    %vm149 = vcmp.eq.s32.totalorder %v148, 1
    %v150 = vsel %vm149, %v144, %v134
    %v151 = vsel %vm149, %v147, %v141
    %v152 = vrot.slane %v150, 1
    %v153 = vrot.slane %v150, 7
    %v154 = vsel %vm111, %v152, %v153
    %v155 = vrot.slane %v151, 1
    %v156 = vrot.slane %v151, 7
    %v157 = vsel %vm111, %v155, %v156
    %v158 = vsel %vm37, 1, 0
    %vm159 = vcmp.eq.s32.totalorder %v158, 1
    %v160 = vsel %vm159, %v154, %v150
    %v161 = vsel %vm159, %v157, %v151
    %v162 = vrot.slane %v160, 4
    %v163 = vrot.slane %v161, 4
    %v164 = vsel %vm38, 1, 0
    %vm165 = vcmp.eq.s32.totalorder %v164, 1
    %v166 = vsel %vm165, %v162, %v160
    %v167 = vsel %vm165, %v163, %v161
    %s168 = scalar_lea.vmem [#allocation2], 24
    %v169 = vld [vmem:[%s168] sm:$0xff]
    %v170 = vld [vmem:[%s168 + $0x8] sm:$0xff]
    %v171 = vld [vmem:[%s168 + $0x10] sm:$0xff]
    %v172 = vrot.slane %v166, 4
    %v173 = vrot.slane %v167, 4
    %v174 = vperm.slane %v169, 0
    %v175 = vperm.slane %v169, 6
    %v176 = vsel %vm47, %v174, %v175
    %v177 = vperm.slane %v169, 1
    %v178 = vperm.slane %v169, 7
    %v179 = vsel %vm47, %v177, %v178
    %v180 = vperm.slane %v169, 2
    %v181 = vperm.slane %v169, 4
    %v182 = vsel %vm47, %v180, %v181
    %v183 = vperm.slane %v169, 3
    %v184 = vperm.slane %v169, 5
    %v185 = vsel %vm47, %v183, %v184
    %v186 = vmul.f32 %v176, %v166
    %v187 = vmul.f32 %v179, %v167
    %v188 = vsub.f32 %v186, %v187
    %v189 = vmul.f32 %v182, %v172
    %v190 = vadd.f32 %v188, %v189
    %v191 = vmul.f32 %v185, %v173
    %v192 = vsub.f32 %v190, %v191
    %v193 = vmul.f32 %v176, %v167
    %v194 = vmul.f32 %v179, %v166
    %v195 = vadd.f32 %v193, %v194
    %v196 = vmul.f32 %v182, %v173
    %v197 = vadd.f32 %v195, %v196
    %v198 = vmul.f32 %v185, %v172
    %v199 = vadd.f32 %v197, %v198
    %v200 = vrot.slane %v192, 2
    %v201 = vrot.slane %v192, 6
    %v202 = vsel %vm77, %v200, %v201
    %v203 = vrot.slane %v199, 2
    %v204 = vrot.slane %v199, 6
    %v205 = vsel %vm77, %v203, %v204
    %v206 = vperm.slane %v170, 0
    %v207 = vperm.slane %v170, 6
    %v208 = vsel %vm77, %v206, %v207
    %v209 = vperm.slane %v170, 1
    %v210 = vperm.slane %v170, 7
    %v211 = vsel %vm77, %v209, %v210
    %v212 = vperm.slane %v170, 2
    %v213 = vperm.slane %v170, 4
    %v214 = vsel %vm77, %v212, %v213
    %v215 = vperm.slane %v170, 3
    %v216 = vperm.slane %v170, 5
    %v217 = vsel %vm77, %v215, %v216
    %v218 = vmul.f32 %v208, %v192
    %v219 = vmul.f32 %v211, %v199
    %v220 = vsub.f32 %v218, %v219
    %v221 = vmul.f32 %v214, %v202
    %v222 = vadd.f32 %v220, %v221
    %v223 = vmul.f32 %v217, %v205
    %v224 = vsub.f32 %v222, %v223
    %v225 = vmul.f32 %v208, %v199
    %v226 = vmul.f32 %v211, %v192
    %v227 = vadd.f32 %v225, %v226
    %v228 = vmul.f32 %v214, %v205
    %v229 = vadd.f32 %v227, %v228
    %v230 = vmul.f32 %v217, %v202
    %v231 = vadd.f32 %v229, %v230
    %v232 = vrot.slane %v224, 1
    %v233 = vrot.slane %v224, 7
    %v234 = vsel %vm111, %v232, %v233
    %v235 = vrot.slane %v231, 1
    %v236 = vrot.slane %v231, 7
    %v237 = vsel %vm111, %v235, %v236
    %v238 = vperm.slane %v171, 0
    %v239 = vperm.slane %v171, 6
    %v240 = vsel %vm111, %v238, %v239
    %v241 = vperm.slane %v171, 1
    %v242 = vperm.slane %v171, 7
    %v243 = vsel %vm111, %v241, %v242
    %v244 = vperm.slane %v171, 2
    %v245 = vperm.slane %v171, 4
    %v246 = vsel %vm111, %v244, %v245
    %v247 = vperm.slane %v171, 3
    %v248 = vperm.slane %v171, 5
    %v249 = vsel %vm111, %v247, %v248
    %v250 = vmul.f32 %v240, %v224
    %v251 = vmul.f32 %v243, %v231
    %v252 = vsub.f32 %v250, %v251
    %v253 = vmul.f32 %v246, %v234
    %v254 = vadd.f32 %v252, %v253
    %v255 = vmul.f32 %v249, %v237
    %v256 = vsub.f32 %v254, %v255
    %v257 = vmul.f32 %v240, %v231
    %v258 = vmul.f32 %v243, %v224
    %v259 = vadd.f32 %v257, %v258
    %v260 = vmul.f32 %v246, %v237
    %v261 = vadd.f32 %v259, %v260
    %v262 = vmul.f32 %v249, %v234
    %v263 = vadd.f32 %v261, %v262
    %v264 = vrot.slane %v256, 2
    %v265 = vrot.slane %v256, 6
    %v266 = vsel %vm77, %v264, %v265
    %v267 = vrot.slane %v263, 2
    %v268 = vrot.slane %v263, 6
    %v269 = vsel %vm77, %v267, %v268
    %v270 = vsel %vm149, %v266, %v256
    %v271 = vsel %vm149, %v269, %v263
    %v272 = vrot.slane %v270, 1
    %v273 = vrot.slane %v270, 7
    %v274 = vsel %vm111, %v272, %v273
    %v275 = vrot.slane %v271, 1
    %v276 = vrot.slane %v271, 7
    %v277 = vsel %vm111, %v275, %v276
    %v278 = vsel %vm159, %v274, %v270
    %v279 = vsel %vm159, %v277, %v271
    %v280 = vrot.slane %v278, 4
    %v281 = vrot.slane %v279, 4
    %v282 = vsel %vm165, %v280, %v278
    %v283 = vsel %vm165, %v281, %v279
    %284 = vst [vmem:[#allocation5] sm:$0xff] %v282
    %285 = vst [vmem:[#allocation6] sm:$0xff] %v283
    // Predicated region
    $region10: #{tpu_custom_call.1} parent=1 // pred_check
      _
    $region11: #{tpu_custom_call.1} parent=1 // pred_check_branch
      %287 = sbr.rel (0) target = $region13
    $region12: #{tpu_custom_call.1} parent=1 // pred_region
      %289 = vsyncadd [#allocation4], 0
      %s291 = sshll.u32 [#allocation5], 4
      %s292 = int_to_ptr.vmem [resolvable:$true] %s291
      %s293 = sshll.u32 %s1, 4
      %s294 = int_to_ptr.hbm [resolvable:$true] %s293
      %296 = dma.vmem_to_hbm [thread:$0]  %s292, 128, %s294, [#allocation4]
    $region13: #{tpu_custom_call.1} parent=1 // pred_fallthru
      _
    // Predicated region
    $region14: #{tpu_custom_call.1} parent=1 // pred_check
      _
    $region15: #{tpu_custom_call.1} parent=1 // pred_check_branch
      %298 = sbr.rel (0) target = $region17
    $region16: #{tpu_custom_call.1} parent=1 // pred_region
      %300 = vsyncadd [#allocation7], 0
      %s302 = sshll.u32 [#allocation6], 4
      %s303 = int_to_ptr.vmem [resolvable:$true] %s302
      %s304 = sshll.u32 %s2, 4
      %s305 = int_to_ptr.hbm [resolvable:$true] %s304
      %307 = dma.vmem_to_hbm [thread:$0]  %s303, 128, %s305, [#allocation7]
    $region17: #{tpu_custom_call.1} parent=1 // pred_fallthru
      _
    // Predicated region
    $region18: #{tpu_custom_call.1} parent=1 // pred_check
      _
    $region19: #{tpu_custom_call.1} parent=1 // pred_check_branch
      %309 = sbr.rel (0) target = $region21
    $region20: #{tpu_custom_call.1} parent=1 // pred_region
      %311 = dma.done [#allocation4], 128
    $region21: #{tpu_custom_call.1} parent=1 // pred_fallthru
      _
    // Predicated region
    $region22: #{tpu_custom_call.1} parent=1 // pred_check
      _
    $region23: #{tpu_custom_call.1} parent=1 // pred_check_branch
      %313 = sbr.rel (0) target = $region25
    $region24: #{tpu_custom_call.1} parent=1 // pred_region
      %315 = dma.done [#allocation7], 128
    $region25: #{tpu_custom_call.1} parent=1 // pred_fallthru
      _
    %316 = vsyncpa [#allocation3], 1
    %317 = vsyncpa [#allocation4], 1
    %318 = vsyncpa [#allocation7], 1

</llo_original>
